<compile_context>
chip_gen: v7x
topology: tpu7x:2x2x1
jax: 0.10.0
libtpu: 0.0.40
codegen_flags: <defaults>
</compile_context>

<pallas_src>
import jax
import jax.numpy as jnp
from jax.experimental import pallas as pl
from jax.experimental.pallas import tpu as pltpu

_LANE = 128           # hidden activation widths are padded to this
_OUT_PAD = 8          # final output padded only to 8 lanes (3 real + 5 zero)
_SUBLANE = 8
_MAX_ROW_TILE = 2048  # sweepable; keeps double-buffered VMEM well under 16 MiB


def _round_up(n, m):
    return ((n + m - 1) // m) * m


def _car_control_kernel(x_ref,
                        w1_ref, b1_ref,
                        w2_ref, b2_ref,
                        w3_ref, b3_ref,
                        wo_ref, bo_ref,
                        o_ref):
    # Matmuls on the MXU (bf16 operands, f32 accumulation); bias-add + sigmoid
    # in f32 on the VPU/EUP; activations re-cast to bf16 between layers.
    x = x_ref[...].astype(jnp.bfloat16)   # in-kernel cast: VPU work, free under
                                          # the HBM roofline (no wrapper copy)
    h = jnp.dot(x, w1_ref[...],
                preferred_element_type=jnp.float32) + b1_ref[...]
    h = jax.nn.sigmoid(h).astype(jnp.bfloat16)

    h = jnp.dot(h, w2_ref[...],
                preferred_element_type=jnp.float32) + b2_ref[...]
    h = jax.nn.sigmoid(h).astype(jnp.bfloat16)

    h = jnp.dot(h, w3_ref[...],
                preferred_element_type=jnp.float32) + b3_ref[...]
    h = jax.nn.sigmoid(h).astype(jnp.bfloat16)

    o_ref[...] = (jnp.dot(h, wo_ref[...],
                          preferred_element_type=jnp.float32)
                  + bo_ref[...]).astype(o_ref.dtype)


def pack_params(params):
    """Zero-pad weights/biases to TPU-friendly shapes; cast weights to bf16.

    * Hidden output widths pad to 128 lanes; the final output pads only to 8.
    * The first layer's input dim (80) stays unpadded so x can be streamed
      straight from HBM; every other layer's input dim equals the previous
      layer's padded output dim.
    Padding is exact: padded hidden columns are sigmoid(0) = 0.5 but always hit
    zero rows of the next padded weight, so they contribute nothing; padded
    final columns are exactly zero (zero weight column + zero bias) and are
    sliced off in the wrapper.
    """
    packed = {}
    d_in_p = params["w1"].shape[0]        # 80: streamed unpadded
    for name in ("1", "2", "3", "o"):
        w = params[f"w{name}"]
        b = params[f"b{name}"]
        d_in, d_out = w.shape
        d_out_p = _round_up(d_out, _OUT_PAD if name == "o" else _LANE)
        packed[f"w{name}"] = jnp.pad(
            w, ((0, d_in_p - d_in), (0, d_out_p - d_out))).astype(jnp.bfloat16)
        packed[f"b{name}"] = jnp.pad(
            b, ((0, 0), (0, d_out_p - d_out))).astype(jnp.float32)
        d_in_p = d_out_p
    return packed


def car_control_forward(x, params, *, max_row_tile=_MAX_ROW_TILE):
    """CarControl forward pass as one Pallas TPU kernel.

    x:      [batch, n_inputs * 10] float32 (streamed as-is, no host-side copy)
    params: dict of w1,b1,...,wo,bo; weights [in, out], biases [1, out].
    Returns [batch, 3] float32.
    """
    batch, d_in = x.shape
    d_out = params["wo"].shape[1]

    packed = pack_params(params)
    w1, b1 = packed["w1"], packed["b1"]
    w2, b2 = packed["w2"], packed["b2"]
    w3, b3 = packed["w3"], packed["b3"]
    wo, bo = packed["wo"], packed["bo"]
    d_out_p = wo.shape[1]

    # Row tile: big enough to amortize per-grid-step overhead, small enough for
    # v5e's 16 MiB default scoped VMEM, and chosen so batches > 8 rows produce
    # >= 2 grid steps (so the "parallel" axis shards across v7x's two TCs).
    # Always a multiple of 8 (sublane), so ragged last blocks are legal.
    tb = max(_SUBLANE,
             min(max_row_tile, _round_up(pl.cdiv(batch, 2), _SUBLANE)))
    n_tiles = pl.cdiv(batch, tb)   # Pallas handles the ragged last block

    def _resident(shape):
        # Full-array block; same block index every grid step => loaded once and
        # kept resident in VMEM while x/out tiles stream.
        return pl.BlockSpec(shape, lambda i: (0, 0))

    in_specs = [
        # x streamed as raw f32 row tiles; last dim 80 == full array dim.
        pl.BlockSpec((tb, d_in), lambda i: (i, 0)),
        _resident(w1.shape), _resident(b1.shape),
        _resident(w2.shape), _resident(b2.shape),
        _resident(w3.shape), _resident(b3.shape),
        _resident(wo.shape), _resident(bo.shape),
    ]
    # Output padded only to 8 lanes -> 32 B/row writeback instead of 512 B/row.
    out_spec = pl.BlockSpec((tb, d_out_p), lambda i: (i, 0))

    out_p = pl.pallas_call(
        _car_control_kernel,
        out_shape=jax.ShapeDtypeStruct((batch, d_out_p), jnp.float32),
        grid=(n_tiles,),
        in_specs=in_specs,
        out_specs=out_spec,
        compiler_params=pltpu.CompilerParams(
            dimension_semantics=("parallel",),  # shard batch tiles over TCs
        ),
    )(x, w1, b1, w2, b2, w3, b3, wo, bo)

    return out_p[:, :d_out]


def init_params(key, n_inputs, layer_sizes):
    """Deterministic PyTorch-nn.Linear-style init (uniform +/- 1/sqrt(fan_in))."""
    dims_in = [n_inputs * 10, layer_sizes[0], layer_sizes[1], layer_sizes[2]]
    dims_out = [layer_sizes[0], layer_sizes[1], layer_sizes[2], 3]
    names = ["1", "2", "3", "o"]
    params = {}
    for name, d_in, d_out in zip(names, dims_in, dims_out):
        key, kw, kb = jax.random.split(key, 3)
        bound = 1.0 / jnp.sqrt(jnp.float32(d_in))
        params[f"w{name}"] = jax.random.uniform(
            kw, (d_in, d_out), jnp.float32, -bound, bound)
        params[f"b{name}"] = jax.random.uniform(
            kb, (1, d_out), jnp.float32, -bound, bound)
    return params


def reference_forward(x, params):
    """Pure-JAX f32 reference of the PyTorch forward."""
    h = jax.nn.sigmoid(x @ params["w1"] + params["b1"])
    h = jax.nn.sigmoid(h @ params["w2"] + params["b2"])
    h = jax.nn.sigmoid(h @ params["w3"] + params["b3"])
    return h @ params["wo"] + params["bo"]


if __name__ == "__main__":
    # Shapes consistent with the module: n_inputs=8 -> input dim 80,
    # hidden sizes [32, 64, 32], output dim 3.
    n_inputs = 8
    layer_sizes = [32, 64, 32]

    key = jax.random.PRNGKey(0)
    key, kx_small, kx_big = jax.random.split(key, 3)
    params = init_params(key, n_inputs, layer_sizes)

    # Small-batch check (single grid step, ragged 4-row block inside tb=8).
    batch = 4
    x = jax.random.normal(kx_small, (batch, n_inputs * 10), jnp.float32)
    out = jax.block_until_ready(car_control_forward(x, params))
    ref = reference_forward(x, params)
    assert out.shape == (batch, 3)
    assert jnp.allclose(out, ref, atol=5e-2, rtol=5e-2), \
        float(jnp.max(jnp.abs(out - ref)))

    # Larger batch: exercises the streaming 1-D grid (>= 2 row tiles so the
    # "parallel" axis shards over both v7x TensorCores) with resident weights.
    big_batch = 1024
    xb = jax.random.normal(kx_big, (big_batch, n_inputs * 10), jnp.float32)
    out_b = jax.block_until_ready(car_control_forward(xb, params))
    ref_b = reference_forward(xb, params)
    assert out_b.shape == (big_batch, 3)
    assert jnp.allclose(out_b, ref_b, atol=5e-2, rtol=5e-2), \
        float(jnp.max(jnp.abs(out_b - ref_b)))

    print("KERNEL_OK")
</pallas_src>

<mosaic_0001>
module attributes {stable_mosaic.version = 11 : i64} {
  func.func @_car_control_kernel(%arg0: i32, %arg1: memref<8x80xf32, #tpu.memory_space<vmem>>, %arg2: memref<80x128xbf16, #tpu.memory_space<vmem>>, %arg3: memref<1x128xf32, #tpu.memory_space<vmem>>, %arg4: memref<128x128xbf16, #tpu.memory_space<vmem>>, %arg5: memref<1x128xf32, #tpu.memory_space<vmem>>, %arg6: memref<128x128xbf16, #tpu.memory_space<vmem>>, %arg7: memref<1x128xf32, #tpu.memory_space<vmem>>, %arg8: memref<128x8xbf16, #tpu.memory_space<vmem>>, %arg9: memref<1x8xf32, #tpu.memory_space<vmem>>, %arg10: memref<8x8xf32, #tpu.memory_space<vmem>>) attributes {dimension_semantics = [#tpu.dimension_semantics<parallel>], iteration_bounds = array<i64: 1>, scalar_prefetch = 0 : i64, scratch_operands = 0 : i64, tpu.core_type = #tpu.core_type<tc>, window_params = [{transform_indices = @transform_0, window_bounds = array<i64: 8, 80>}, {pipeline_mode = #tpu.pipeline_mode<synchronous>, transform_indices = @transform_1, window_bounds = array<i64: 80, 128>}, {pipeline_mode = #tpu.pipeline_mode<synchronous>, transform_indices = @transform_2, window_bounds = array<i64: 1, 128>}, {pipeline_mode = #tpu.pipeline_mode<synchronous>, transform_indices = @transform_3, window_bounds = array<i64: 128, 128>}, {pipeline_mode = #tpu.pipeline_mode<synchronous>, transform_indices = @transform_4, window_bounds = array<i64: 1, 128>}, {pipeline_mode = #tpu.pipeline_mode<synchronous>, transform_indices = @transform_5, window_bounds = array<i64: 128, 128>}, {pipeline_mode = #tpu.pipeline_mode<synchronous>, transform_indices = @transform_6, window_bounds = array<i64: 1, 128>}, {pipeline_mode = #tpu.pipeline_mode<synchronous>, transform_indices = @transform_7, window_bounds = array<i64: 128, 8>}, {pipeline_mode = #tpu.pipeline_mode<synchronous>, transform_indices = @transform_8, window_bounds = array<i64: 1, 8>}, {transform_indices = @transform_9, window_bounds = array<i64: 8, 8>}]} {
    %c0 = arith.constant 0 : index
    %c0_0 = arith.constant 0 : index
    %0 = vector.load %arg1[%c0, %c0_0] : memref<8x80xf32, #tpu.memory_space<vmem>>, vector<8x80xf32>
    %1 = arith.truncf %0 : vector<8x80xf32> to vector<8x80xbf16>
    %c0_1 = arith.constant 0 : index
    %c0_2 = arith.constant 0 : index
    %2 = vector.load %arg2[%c0_1, %c0_2] : memref<80x128xbf16, #tpu.memory_space<vmem>>, vector<80x128xbf16>
    %cst = arith.constant dense<0.000000e+00> : vector<8x128xf32>
    %3 = tpu.matmul %1, %2, %cst {dimension_numbers = #tpu.dot_dimension_numbers<[1], [0], [0], [1], [0, 0, 1, 1], [], []>} : vector<8x80xbf16>, vector<80x128xbf16>, vector<8x128xf32> -> vector<8x128xf32>
    %c0_3 = arith.constant 0 : index
    %c0_4 = arith.constant 0 : index
    %4 = vector.load %arg3[%c0_3, %c0_4] : memref<1x128xf32, #tpu.memory_space<vmem>>, vector<1x128xf32>
    %5 = vector.broadcast %4 : vector<1x128xf32> to vector<8x128xf32>
    %6 = arith.addf %3, %5 : vector<8x128xf32>
    %7 = arith.negf %6 : vector<8x128xf32>
    %8 = math.exp %7 : vector<8x128xf32>
    %cst_5 = arith.constant 1.000000e+00 : f32
    %9 = vector.broadcast %cst_5 : f32 to vector<8x128xf32>
    %10 = arith.addf %9, %8 : vector<8x128xf32>
    %11 = arith.divf %9, %10 : vector<8x128xf32>
    %12 = arith.truncf %11 : vector<8x128xf32> to vector<8x128xbf16>
    %c0_6 = arith.constant 0 : index
    %c0_7 = arith.constant 0 : index
    %13 = vector.load %arg4[%c0_6, %c0_7] : memref<128x128xbf16, #tpu.memory_space<vmem>>, vector<128x128xbf16>
    %cst_8 = arith.constant dense<0.000000e+00> : vector<8x128xf32>
    %14 = tpu.matmul %12, %13, %cst_8 {dimension_numbers = #tpu.dot_dimension_numbers<[1], [0], [0], [1], [0, 0, 1, 1], [], []>} : vector<8x128xbf16>, vector<128x128xbf16>, vector<8x128xf32> -> vector<8x128xf32>
    %c0_9 = arith.constant 0 : index
    %c0_10 = arith.constant 0 : index
    %15 = vector.load %arg5[%c0_9, %c0_10] : memref<1x128xf32, #tpu.memory_space<vmem>>, vector<1x128xf32>
    %16 = vector.broadcast %15 : vector<1x128xf32> to vector<8x128xf32>
    %17 = arith.addf %14, %16 : vector<8x128xf32>
    %18 = arith.negf %17 : vector<8x128xf32>
    %19 = math.exp %18 : vector<8x128xf32>
    %cst_11 = arith.constant 1.000000e+00 : f32
    %20 = vector.broadcast %cst_11 : f32 to vector<8x128xf32>
    %21 = arith.addf %20, %19 : vector<8x128xf32>
    %22 = arith.divf %20, %21 : vector<8x128xf32>
    %23 = arith.truncf %22 : vector<8x128xf32> to vector<8x128xbf16>
    %c0_12 = arith.constant 0 : index
    %c0_13 = arith.constant 0 : index
    %24 = vector.load %arg6[%c0_12, %c0_13] : memref<128x128xbf16, #tpu.memory_space<vmem>>, vector<128x128xbf16>
    %cst_14 = arith.constant dense<0.000000e+00> : vector<8x128xf32>
    %25 = tpu.matmul %23, %24, %cst_14 {dimension_numbers = #tpu.dot_dimension_numbers<[1], [0], [0], [1], [0, 0, 1, 1], [], []>} : vector<8x128xbf16>, vector<128x128xbf16>, vector<8x128xf32> -> vector<8x128xf32>
    %c0_15 = arith.constant 0 : index
    %c0_16 = arith.constant 0 : index
    %26 = vector.load %arg7[%c0_15, %c0_16] : memref<1x128xf32, #tpu.memory_space<vmem>>, vector<1x128xf32>
    %27 = vector.broadcast %26 : vector<1x128xf32> to vector<8x128xf32>
    %28 = arith.addf %25, %27 : vector<8x128xf32>
    %29 = arith.negf %28 : vector<8x128xf32>
    %30 = math.exp %29 : vector<8x128xf32>
    %cst_17 = arith.constant 1.000000e+00 : f32
    %31 = vector.broadcast %cst_17 : f32 to vector<8x128xf32>
    %32 = arith.addf %31, %30 : vector<8x128xf32>
    %33 = arith.divf %31, %32 : vector<8x128xf32>
    %34 = arith.truncf %33 : vector<8x128xf32> to vector<8x128xbf16>
    %c0_18 = arith.constant 0 : index
    %c0_19 = arith.constant 0 : index
    %35 = vector.load %arg8[%c0_18, %c0_19] : memref<128x8xbf16, #tpu.memory_space<vmem>>, vector<128x8xbf16>
    %cst_20 = arith.constant dense<0.000000e+00> : vector<8x8xf32>
    %36 = tpu.matmul %34, %35, %cst_20 {dimension_numbers = #tpu.dot_dimension_numbers<[1], [0], [0], [1], [0, 0, 1, 1], [], []>} : vector<8x128xbf16>, vector<128x8xbf16>, vector<8x8xf32> -> vector<8x8xf32>
    %c0_21 = arith.constant 0 : index
    %c0_22 = arith.constant 0 : index
    %37 = vector.load %arg9[%c0_21, %c0_22] : memref<1x8xf32, #tpu.memory_space<vmem>>, vector<1x8xf32>
    %38 = vector.broadcast %37 : vector<1x8xf32> to vector<8x8xf32>
    %39 = arith.addf %36, %38 : vector<8x8xf32>
    %c0_23 = arith.constant 0 : index
    %c0_24 = arith.constant 0 : index
    %40 = vector.load %arg10[%c0_23, %c0_24] : memref<8x8xf32, #tpu.memory_space<vmem>>, vector<8x8xf32>
    tpu.vector_store %arg10[%c0_23, %c0_24], %39 {strides = array<i32>} : memref<8x8xf32, #tpu.memory_space<vmem>>, vector<8x8xf32>,
    return
  }
  func.func @transform_0(%arg0: i32) -> (i32, i32) {
    %c0_i32 = arith.constant 0 : i32
    %c0_i32_0 = arith.constant 0 : i32
    return %arg0, %c0_i32 : i32, i32
  }
  func.func @transform_1(%arg0: i32) -> (i32, i32) {
    %c0_i32 = arith.constant 0 : i32
    %c0_i32_0 = arith.constant 0 : i32
    %c0_i32_1 = arith.constant 0 : i32
    return %c0_i32, %c0_i32_0 : i32, i32
  }
  func.func @transform_2(%arg0: i32) -> (i32, i32) {
    %c0_i32 = arith.constant 0 : i32
    %c0_i32_0 = arith.constant 0 : i32
    %c0_i32_1 = arith.constant 0 : i32
    return %c0_i32, %c0_i32_0 : i32, i32
  }
  func.func @transform_3(%arg0: i32) -> (i32, i32) {
    %c0_i32 = arith.constant 0 : i32
    %c0_i32_0 = arith.constant 0 : i32
    %c0_i32_1 = arith.constant 0 : i32
    return %c0_i32, %c0_i32_0 : i32, i32
  }
  func.func @transform_4(%arg0: i32) -> (i32, i32) {
    %c0_i32 = arith.constant 0 : i32
    %c0_i32_0 = arith.constant 0 : i32
    %c0_i32_1 = arith.constant 0 : i32
    return %c0_i32, %c0_i32_0 : i32, i32
  }
  func.func @transform_5(%arg0: i32) -> (i32, i32) {
    %c0_i32 = arith.constant 0 : i32
    %c0_i32_0 = arith.constant 0 : i32
    %c0_i32_1 = arith.constant 0 : i32
    return %c0_i32, %c0_i32_0 : i32, i32
  }
  func.func @transform_6(%arg0: i32) -> (i32, i32) {
    %c0_i32 = arith.constant 0 : i32
    %c0_i32_0 = arith.constant 0 : i32
    %c0_i32_1 = arith.constant 0 : i32
    return %c0_i32, %c0_i32_0 : i32, i32
  }
  func.func @transform_7(%arg0: i32) -> (i32, i32) {
    %c0_i32 = arith.constant 0 : i32
    %c0_i32_0 = arith.constant 0 : i32
    %c0_i32_1 = arith.constant 0 : i32
    return %c0_i32, %c0_i32_0 : i32, i32
  }
  func.func @transform_8(%arg0: i32) -> (i32, i32) {
    %c0_i32 = arith.constant 0 : i32
    %c0_i32_0 = arith.constant 0 : i32
    %c0_i32_1 = arith.constant 0 : i32
    return %c0_i32, %c0_i32_0 : i32, i32
  }
  func.func @transform_9(%arg0: i32) -> (i32, i32) {
    %c0_i32 = arith.constant 0 : i32
    %c0_i32_0 = arith.constant 0 : i32
    return %arg0, %c0_i32 : i32, i32
  }
}

</mosaic_0001>

<llo_original>
// kernel: tpu_custom_call.1
$region0: #{tpu_custom_call.1}
  #allocation0 [shape = 'u32[]', space=smem, size = 0x4, offset = 0x4, fixed_abs, tag = 'smem constant byte address 0x4 - core index']
  #allocation1 [shape = 'u32[144,128]{1,0:T(1,128)}', space=vmem, size = 0x12000, scoped, tag = 'internal scratch']
  %s0 = inlined_call_operand.vmem [shape: f32[4,80], index: 0, kind: input, shape index: {}]
  %s1 = inlined_call_operand.hbm [shape: bf16[80,128], index: 1, kind: input, shape index: {}]
  %s2 = inlined_call_operand.vmem [shape: f32[1,128], index: 2, kind: input, shape index: {}]
  %s3 = inlined_call_operand.vmem [shape: bf16[128,128], index: 3, kind: input, shape index: {}]
  %s4 = inlined_call_operand.vmem [shape: f32[1,128], index: 4, kind: input, shape index: {}]
  %s5 = inlined_call_operand.hbm [shape: bf16[128,128], index: 5, kind: input, shape index: {}]
  %s6 = inlined_call_operand.vmem [shape: f32[1,128], index: 6, kind: input, shape index: {}]
  %s7 = inlined_call_operand.vmem [shape: bf16[128,8], index: 7, kind: input, shape index: {}]
  %s8 = inlined_call_operand.vmem [shape: f32[1,8], index: 8, kind: input, shape index: {}]
  %s9 = inlined_call_operand.hbm [shape: f32[4,8], index: 9, kind: output, shape index: {}]
  %s10 = sld [smem:[#allocation0]]
  $region54: #{tpu_custom_call.1} parent=0
    _
  %s12 = ssub.s32 1, %s10
  %s13 = scalar_select 0, %s12, %s10
  $region1: #{tpu_custom_call.1} parent=0
    #allocation2 [shape = 'u8[20480]{0}', space=vmem, size = 0x5000, scoped, tag = 'input window, operand 1, single buffered']
    #allocation3 [shape = 's32[1]{0}', space=sflag, size = 0x4, scoped, tag = 'scoped memory for tpu_custom_call.1']
    #allocation4 [shape = 's32[1]{0}', space=sflag, size = 0x4, scoped, tag = 'scoped memory for tpu_custom_call.1']
    #allocation5 [shape = 'u8[32768]{0}', space=vmem, size = 0x8000, scoped, tag = 'input window, operand 5, single buffered']
    #allocation6 [shape = 's32[1]{0}', space=sflag, size = 0x4, scoped, tag = 'scoped memory for tpu_custom_call.1']
    #allocation7 [shape = 'u8[4096]{0}', space=vmem, size = 0x1000, scoped, tag = 'output window, operand 0, single buffered']
    %14 = vsyncpa [#allocation3], 0
    %15 = vsyncpa [#allocation6], 0
    %16 = vsyncpa [#allocation4], 0
    // Predicated region
    $region2: #{tpu_custom_call.1} parent=1 // pred_check
      _
    $region3: #{tpu_custom_call.1} parent=1 // pred_check_branch
      %18 = sbr.rel (0) target = $region5
    $region4: #{tpu_custom_call.1} parent=1 // pred_region
      _
    $region5: #{tpu_custom_call.1} parent=1 // pred_fallthru
      _
    // Predicated region
    $region6: #{tpu_custom_call.1} parent=1 // pred_check
      _
    $region7: #{tpu_custom_call.1} parent=1 // pred_check_branch
      %20 = sbr.rel (0) target = $region9
    $region8: #{tpu_custom_call.1} parent=1 // pred_region
      %s22 = ssub.s32 640, 640
      %23 = vsyncadd [#allocation3], %s22
      %s24 = sshll.u32 [#allocation2], 4
      %s25 = int_to_ptr.vmem [resolvable:$true] %s24
      %30 = dma.hbm_to_vmem [thread:$0]  %s1, 640, %s25, [#allocation3], 64, 64, 4
    $region9: #{tpu_custom_call.1} parent=1 // pred_fallthru
      _
    // Predicated region
    $region10: #{tpu_custom_call.1} parent=1 // pred_check
      _
    $region11: #{tpu_custom_call.1} parent=1 // pred_check_branch
      %32 = sbr.rel (0) target = $region13
    $region12: #{tpu_custom_call.1} parent=1 // pred_region
      _
    $region13: #{tpu_custom_call.1} parent=1 // pred_fallthru
      _
    // Predicated region
    $region14: #{tpu_custom_call.1} parent=1 // pred_check
      _
    $region15: #{tpu_custom_call.1} parent=1 // pred_check_branch
      %34 = sbr.rel (0) target = $region17
    $region16: #{tpu_custom_call.1} parent=1 // pred_region
      _
    $region17: #{tpu_custom_call.1} parent=1 // pred_fallthru
      _
    // Predicated region
    $region18: #{tpu_custom_call.1} parent=1 // pred_check
      _
    $region19: #{tpu_custom_call.1} parent=1 // pred_check_branch
      %36 = sbr.rel (0) target = $region21
    $region20: #{tpu_custom_call.1} parent=1 // pred_region
      _
    $region21: #{tpu_custom_call.1} parent=1 // pred_fallthru
      _
    // Predicated region
    $region22: #{tpu_custom_call.1} parent=1 // pred_check
      _
    $region23: #{tpu_custom_call.1} parent=1 // pred_check_branch
      %38 = sbr.rel (0) target = $region25
    $region24: #{tpu_custom_call.1} parent=1 // pred_region
      %s40 = ssub.s32 1024, 1024
      %41 = vsyncadd [#allocation6], %s40
      %s42 = sshll.u32 [#allocation5], 4
      %s43 = int_to_ptr.vmem [resolvable:$true] %s42
      %48 = dma.hbm_to_vmem [thread:$0]  %s5, 1024, %s43, [#allocation6], 64, 64, 4
    $region25: #{tpu_custom_call.1} parent=1 // pred_fallthru
      _
    // Predicated region
    $region26: #{tpu_custom_call.1} parent=1 // pred_check
      _
    $region27: #{tpu_custom_call.1} parent=1 // pred_check_branch
      %50 = sbr.rel (0) target = $region29
    $region28: #{tpu_custom_call.1} parent=1 // pred_region
      _
    $region29: #{tpu_custom_call.1} parent=1 // pred_fallthru
      _
    // Predicated region
    $region30: #{tpu_custom_call.1} parent=1 // pred_check
      _
    $region31: #{tpu_custom_call.1} parent=1 // pred_check_branch
      %52 = sbr.rel (0) target = $region33
    $region32: #{tpu_custom_call.1} parent=1 // pred_region
      _
    $region33: #{tpu_custom_call.1} parent=1 // pred_fallthru
      _
    // Predicated region
    $region34: #{tpu_custom_call.1} parent=1 // pred_check
      _
    $region35: #{tpu_custom_call.1} parent=1 // pred_check_branch
      %54 = sbr.rel (0) target = $region37
    $region36: #{tpu_custom_call.1} parent=1 // pred_region
      _
    $region37: #{tpu_custom_call.1} parent=1 // pred_fallthru
      _
    // Predicated region
    $region38: #{tpu_custom_call.1} parent=1 // pred_check
      _
    $region39: #{tpu_custom_call.1} parent=1 // pred_check_branch
      %56 = sbr.rel (0) target = $region41
    $region40: #{tpu_custom_call.1} parent=1 // pred_region
      %57 = dma.done [#allocation3], 640
    $region41: #{tpu_custom_call.1} parent=1 // pred_fallthru
      _
    // Predicated region
    $region42: #{tpu_custom_call.1} parent=1 // pred_check
      _
    $region43: #{tpu_custom_call.1} parent=1 // pred_check_branch
      %59 = sbr.rel (0) target = $region45
    $region44: #{tpu_custom_call.1} parent=1 // pred_region
      %60 = dma.done [#allocation6], 1024
    $region45: #{tpu_custom_call.1} parent=1 // pred_fallthru
      _
    %v62 = vld [vmem:[%s0] sm:$0xff]
    %v63 = vpack.c.bf16 %v62, %v62
    %v64 = vld [vmem:[#allocation2] sm:$0xf]
    %v65 = vld [vmem:[#allocation2 + $0x4] sm:$0xf]
    %v66 = vld [vmem:[#allocation2 + $0x8] sm:$0xf]
    %v67 = vld [vmem:[#allocation2 + $0xc] sm:$0xf]
    %v68 = vld [vmem:[#allocation2 + $0x10] sm:$0xf]
    %v69 = vld [vmem:[#allocation2 + $0x14] sm:$0xf]
    %v70 = vld [vmem:[#allocation2 + $0x18] sm:$0xf]
    %v71 = vld [vmem:[#allocation2 + $0x1c] sm:$0xf]
    %v72 = vld [vmem:[#allocation2 + $0x20] sm:$0xf]
    %v73 = vld [vmem:[#allocation2 + $0x24] sm:$0xf]
    %v74 = vld [vmem:[%s2] sm:$0x1]
    %v76 = vlaneseq
    %v77 = vshrl.u32 %v76, 7
    %v78 = vsub.s32 0, %v77
    %v79 = vrot.slane %v74, %v78
    %v91 = vunpack.c.l.b16 %v64
    %v92 = vunpack.c.l.b16 %v65
    %v93 = vunpack.c.l.b16 %v66
    %v94 = vunpack.c.l.b16 %v67
    %v95 = vunpack.c.l.b16 %v68
    %v96 = vunpack.c.l.b16 %v69
    %v97 = vunpack.c.l.b16 %v70
    %v98 = vunpack.c.l.b16 %v71
    %v99 = vunpack.c.l.b16 %v72
    %v100 = vunpack.c.l.b16 %v73
    %v101 = vpack.c.b16 %v92, %v91
    %v102 = vpack.c.b16 %v94, %v93
    %v103 = vpack.c.b16 %v96, %v95
    %v104 = vpack.c.b16 %v98, %v97
    %v105 = vpack.c.b16 %v100, %v99
    %vm111 = vcmask 654336
    %v113 = vsel %vm111, %v63, 0
    %115 = vmatprep.subr.bf16.mxu0 0
    %116 = vmatpush1.bf16.msra.mxu0 %v101
    %117 = vmatprep.subr.bf16.mxu0 0
    %118 = vmatpush1.bf16.msra.mxu0 %v102
    %119 = vmatprep.subr.bf16.mxu0 0
    %120 = vmatpush1.bf16.msra.mxu0 %v103
    %121 = vmatprep.subr.bf16.mxu0 0
    %122 = vmatpush1.bf16.msra.mxu0 %v104
    %123 = vmatprep.subr.bf16.mxu0 0
    %124 = vmatpush1.bf16.msra.mxu0 %v105
    %125 = vmatprep.subr.bf16.mxu0 0
    %126 = vmatpush1.bf16.msra.mxu0 0
    %127 = vmatprep.subr.bf16.mxu0 0
    %128 = vmatpush1.bf16.msra.mxu0 0
    %129 = vmatprep.subr.bf16.mxu0 0
    %130 = vmatpush1.bf16.msra.mxu0 0
    %131 = vmatprep.subr.bf16.mxu0 0
    %132 = vmatpush1.bf16.msra.mxu0 0
    %133 = vmatprep.subr.bf16.mxu0 0
    %134 = vmatpush1.bf16.msra.mxu0 0
    %135 = vmatprep.subr.bf16.mxu0 0
    %136 = vmatpush1.bf16.msra.mxu0 0
    %137 = vmatprep.subr.bf16.mxu0 0
    %138 = vmatpush1.bf16.msra.mxu0 0
    %139 = vmatprep.subr.bf16.mxu0 0
    %140 = vmatpush1.bf16.msra.mxu0 0
    %141 = vmatprep.subr.bf16.mxu0 0
    %142 = vmatpush1.bf16.msra.mxu0 0
    %143 = vmatprep.subr.bf16.mxu0 0
    %144 = vmatpush1.bf16.msra.mxu0 0
    %145 = vmatprep.subr.bf16.mxu0 0
    %146 = vmatpush1.bf16.msra.mxu0 0
    %147 = vmatprep.mubr.bf16.mxu0 0
    %148 = vmatmul.mubr.bf16.gmra.mrb[0].mxu0 %v113
    %v149 = vpop.f32.mrb[0].mxu0
    %v150 = vadd.f32 %v79, %v149
    %v151 = vpop.f32.mrb[0].mxu0
    %v152 = vpop.f32.mrb[0].mxu0
    %v153 = vpop.f32.mrb[0].mxu0
    %154 = vdwg.mxu0
    %v155 = vxor.u32 %v150, 2147483648
    %v156 = vmul.f32 %v155, 1.442695
    %v157 = vpow.pop %v156
    %v158 = vadd.f32 %v157, 1.0
    %v159 = vrcp.pop %v158
    %v160 = vmul.f32 1.0, %v159
    %v161 = vpack.c.bf16 %v160, %v160
    %v162 = vld [vmem:[%s3] sm:$0xf]
    %v163 = vld [vmem:[%s3 + $0x4] sm:$0xf]
    %v164 = vld [vmem:[%s3 + $0x8] sm:$0xf]
    %v165 = vld [vmem:[%s3 + $0xc] sm:$0xf]
    %v166 = vld [vmem:[%s3 + $0x10] sm:$0xf]
    %v167 = vld [vmem:[%s3 + $0x14] sm:$0xf]
    %v168 = vld [vmem:[%s3 + $0x18] sm:$0xf]
    %v169 = vld [vmem:[%s3 + $0x1c] sm:$0xf]
    %v170 = vld [vmem:[%s3 + $0x20] sm:$0xf]
    %v171 = vld [vmem:[%s3 + $0x24] sm:$0xf]
    %v172 = vld [vmem:[%s3 + $0x28] sm:$0xf]
    %v173 = vld [vmem:[%s3 + $0x2c] sm:$0xf]
    %v174 = vld [vmem:[%s3 + $0x30] sm:$0xf]
    %v175 = vld [vmem:[%s3 + $0x34] sm:$0xf]
    %v176 = vld [vmem:[%s3 + $0x38] sm:$0xf]
    %v177 = vld [vmem:[%s3 + $0x3c] sm:$0xf]
    %v178 = vld [vmem:[%s4] sm:$0x1]
    %v180 = vlaneseq
    %v181 = vshrl.u32 %v180, 7
    %v182 = vsub.s32 0, %v181
    %v183 = vrot.slane %v178, %v182
    %v201 = vunpack.c.l.b16 %v162
    %v202 = vunpack.c.l.b16 %v163
    %v203 = vunpack.c.l.b16 %v164
    %v204 = vunpack.c.l.b16 %v165
    %v205 = vunpack.c.l.b16 %v166
    %v206 = vunpack.c.l.b16 %v167
    %v207 = vunpack.c.l.b16 %v168
    %v208 = vunpack.c.l.b16 %v169
    %v209 = vunpack.c.l.b16 %v170
    %v210 = vunpack.c.l.b16 %v171
    %v211 = vunpack.c.l.b16 %v172
    %v212 = vunpack.c.l.b16 %v173
    %v213 = vunpack.c.l.b16 %v174
    %v214 = vunpack.c.l.b16 %v175
    %v215 = vunpack.c.l.b16 %v176
    %v216 = vunpack.c.l.b16 %v177
    %v217 = vpack.c.b16 %v202, %v201
    %v218 = vpack.c.b16 %v204, %v203
    %v219 = vpack.c.b16 %v206, %v205
    %v220 = vpack.c.b16 %v208, %v207
    %v221 = vpack.c.b16 %v210, %v209
    %v222 = vpack.c.b16 %v212, %v211
    %v223 = vpack.c.b16 %v214, %v213
    %v224 = vpack.c.b16 %v216, %v215
    %233 = vmatprep.subr.bf16.mxu0 0
    %234 = vmatpush1.bf16.msra.mxu0 %v217
    %235 = vmatprep.subr.bf16.mxu0 0
    %236 = vmatpush1.bf16.msra.mxu0 %v218
    %237 = vmatprep.subr.bf16.mxu0 0
    %238 = vmatpush1.bf16.msra.mxu0 %v219
    %239 = vmatprep.subr.bf16.mxu0 0
    %240 = vmatpush1.bf16.msra.mxu0 %v220
    %241 = vmatprep.subr.bf16.mxu0 0
    %242 = vmatpush1.bf16.msra.mxu0 %v221
    %243 = vmatprep.subr.bf16.mxu0 0
    %244 = vmatpush1.bf16.msra.mxu0 %v222
    %245 = vmatprep.subr.bf16.mxu0 0
    %246 = vmatpush1.bf16.msra.mxu0 %v223
    %247 = vmatprep.subr.bf16.mxu0 0
    %248 = vmatpush1.bf16.msra.mxu0 %v224
    %249 = vmatprep.subr.bf16.mxu0 0
    %250 = vmatpush1.bf16.msra.mxu0 0
    %251 = vmatprep.subr.bf16.mxu0 0
    %252 = vmatpush1.bf16.msra.mxu0 0
    %253 = vmatprep.subr.bf16.mxu0 0
    %254 = vmatpush1.bf16.msra.mxu0 0
    %255 = vmatprep.subr.bf16.mxu0 0
    %256 = vmatpush1.bf16.msra.mxu0 0
    %257 = vmatprep.subr.bf16.mxu0 0
    %258 = vmatpush1.bf16.msra.mxu0 0
    %259 = vmatprep.subr.bf16.mxu0 0
    %260 = vmatpush1.bf16.msra.mxu0 0
    %261 = vmatprep.subr.bf16.mxu0 0
    %262 = vmatpush1.bf16.msra.mxu0 0
    %263 = vmatprep.subr.bf16.mxu0 0
    %264 = vmatpush1.bf16.msra.mxu0 0
    %265 = vmatprep.mubr.bf16.mxu0 0
    %266 = vmatmul.mubr.bf16.gmra.mrb[0].mxu0 %v161
    %v267 = vpop.f32.mrb[0].mxu0
    %v268 = vadd.f32 %v183, %v267
    %v269 = vpop.f32.mrb[0].mxu0
    %v270 = vpop.f32.mrb[0].mxu0
    %v271 = vpop.f32.mrb[0].mxu0
    %272 = vdwg.mxu0
    %v273 = vxor.u32 %v268, 2147483648
    %v274 = vmul.f32 %v273, 1.442695
    %v275 = vpow.pop %v274
    %v276 = vadd.f32 %v275, 1.0
    %v277 = vrcp.pop %v276
    %v278 = vmul.f32 1.0, %v277
    %v279 = vpack.c.bf16 %v278, %v278
    %v280 = vld [vmem:[#allocation5] sm:$0xf]
    %v281 = vld [vmem:[#allocation5 + $0x4] sm:$0xf]
    %v282 = vld [vmem:[#allocation5 + $0x8] sm:$0xf]
    %v283 = vld [vmem:[#allocation5 + $0xc] sm:$0xf]
    %v284 = vld [vmem:[#allocation5 + $0x10] sm:$0xf]
    %v285 = vld [vmem:[#allocation5 + $0x14] sm:$0xf]
    %v286 = vld [vmem:[#allocation5 + $0x18] sm:$0xf]
    %v287 = vld [vmem:[#allocation5 + $0x1c] sm:$0xf]
    %v288 = vld [vmem:[#allocation5 + $0x20] sm:$0xf]
    %v289 = vld [vmem:[#allocation5 + $0x24] sm:$0xf]
    %v290 = vld [vmem:[#allocation5 + $0x28] sm:$0xf]
    %v291 = vld [vmem:[#allocation5 + $0x2c] sm:$0xf]
    %v292 = vld [vmem:[#allocation5 + $0x30] sm:$0xf]
    %v293 = vld [vmem:[#allocation5 + $0x34] sm:$0xf]
    %v294 = vld [vmem:[#allocation5 + $0x38] sm:$0xf]
    %v295 = vld [vmem:[#allocation5 + $0x3c] sm:$0xf]
    %v296 = vld [vmem:[%s6] sm:$0x1]
    %v298 = vlaneseq
    %v299 = vshrl.u32 %v298, 7
    %v300 = vsub.s32 0, %v299
    %v301 = vrot.slane %v296, %v300
    %v319 = vunpack.c.l.b16 %v280
    %v320 = vunpack.c.l.b16 %v281
    %v321 = vunpack.c.l.b16 %v282
    %v322 = vunpack.c.l.b16 %v283
    %v323 = vunpack.c.l.b16 %v284
    %v324 = vunpack.c.l.b16 %v285
    %v325 = vunpack.c.l.b16 %v286
    %v326 = vunpack.c.l.b16 %v287
    %v327 = vunpack.c.l.b16 %v288
    %v328 = vunpack.c.l.b16 %v289
    %v329 = vunpack.c.l.b16 %v290
    %v330 = vunpack.c.l.b16 %v291
    %v331 = vunpack.c.l.b16 %v292
    %v332 = vunpack.c.l.b16 %v293
    %v333 = vunpack.c.l.b16 %v294
    %v334 = vunpack.c.l.b16 %v295
    %v335 = vpack.c.b16 %v320, %v319
    %v336 = vpack.c.b16 %v322, %v321
    %v337 = vpack.c.b16 %v324, %v323
    %v338 = vpack.c.b16 %v326, %v325
    %v339 = vpack.c.b16 %v328, %v327
    %v340 = vpack.c.b16 %v330, %v329
    %v341 = vpack.c.b16 %v332, %v331
    %v342 = vpack.c.b16 %v334, %v333
    %351 = vmatprep.subr.bf16.mxu0 0
    %352 = vmatpush1.bf16.msra.mxu0 %v335
    %353 = vmatprep.subr.bf16.mxu0 0
    %354 = vmatpush1.bf16.msra.mxu0 %v336
    %355 = vmatprep.subr.bf16.mxu0 0
    %356 = vmatpush1.bf16.msra.mxu0 %v337
    %357 = vmatprep.subr.bf16.mxu0 0
    %358 = vmatpush1.bf16.msra.mxu0 %v338
    %359 = vmatprep.subr.bf16.mxu0 0
    %360 = vmatpush1.bf16.msra.mxu0 %v339
    %361 = vmatprep.subr.bf16.mxu0 0
    %362 = vmatpush1.bf16.msra.mxu0 %v340
    %363 = vmatprep.subr.bf16.mxu0 0
    %364 = vmatpush1.bf16.msra.mxu0 %v341
    %365 = vmatprep.subr.bf16.mxu0 0
    %366 = vmatpush1.bf16.msra.mxu0 %v342
    %367 = vmatprep.subr.bf16.mxu0 0
    %368 = vmatpush1.bf16.msra.mxu0 0
    %369 = vmatprep.subr.bf16.mxu0 0
    %370 = vmatpush1.bf16.msra.mxu0 0
    %371 = vmatprep.subr.bf16.mxu0 0
    %372 = vmatpush1.bf16.msra.mxu0 0
    %373 = vmatprep.subr.bf16.mxu0 0
    %374 = vmatpush1.bf16.msra.mxu0 0
    %375 = vmatprep.subr.bf16.mxu0 0
    %376 = vmatpush1.bf16.msra.mxu0 0
    %377 = vmatprep.subr.bf16.mxu0 0
    %378 = vmatpush1.bf16.msra.mxu0 0
    %379 = vmatprep.subr.bf16.mxu0 0
    %380 = vmatpush1.bf16.msra.mxu0 0
    %381 = vmatprep.subr.bf16.mxu0 0
    %382 = vmatpush1.bf16.msra.mxu0 0
    %383 = vmatprep.mubr.bf16.mxu0 0
    %384 = vmatmul.mubr.bf16.gmra.mrb[0].mxu0 %v279
    %v385 = vpop.f32.mrb[0].mxu0
    %v386 = vadd.f32 %v301, %v385
    %v387 = vpop.f32.mrb[0].mxu0
    %v388 = vpop.f32.mrb[0].mxu0
    %v389 = vpop.f32.mrb[0].mxu0
    %390 = vdwg.mxu0
    %v391 = vxor.u32 %v386, 2147483648
    %v392 = vmul.f32 %v391, 1.442695
    %v393 = vpow.pop %v392
    %v394 = vadd.f32 %v393, 1.0
    %v395 = vrcp.pop %v394
    %v396 = vmul.f32 1.0, %v395
    %v397 = vpack.c.bf16 %v396, %v396
    %v398 = vld [vmem:[%s7] sm:$0xf]
    %v399 = vld [vmem:[%s7 + $0x4] sm:$0xf]
    %v400 = vld [vmem:[%s7 + $0x8] sm:$0xf]
    %v401 = vld [vmem:[%s7 + $0xc] sm:$0xf]
    %v402 = vld [vmem:[%s7 + $0x10] sm:$0xf]
    %v403 = vld [vmem:[%s7 + $0x14] sm:$0xf]
    %v404 = vld [vmem:[%s7 + $0x18] sm:$0xf]
    %v405 = vld [vmem:[%s7 + $0x1c] sm:$0xf]
    %v406 = vld [vmem:[%s7 + $0x20] sm:$0xf]
    %v407 = vld [vmem:[%s7 + $0x24] sm:$0xf]
    %v408 = vld [vmem:[%s7 + $0x28] sm:$0xf]
    %v409 = vld [vmem:[%s7 + $0x2c] sm:$0xf]
    %v410 = vld [vmem:[%s7 + $0x30] sm:$0xf]
    %v411 = vld [vmem:[%s7 + $0x34] sm:$0xf]
    %v412 = vld [vmem:[%s7 + $0x38] sm:$0xf]
    %v413 = vld [vmem:[%s7 + $0x3c] sm:$0xf]
    %v414 = vld [vmem:[%s8] sm:$0x1]
    %v416 = vlaneseq
    %v417 = vshrl.u32 %v416, 7
    %v418 = vsub.s32 0, %v417
    %v419 = vrot.slane %v414, %v418
    %v437 = vunpack.c.l.b16 %v398
    %v438 = vunpack.c.l.b16 %v399
    %v439 = vunpack.c.l.b16 %v400
    %v440 = vunpack.c.l.b16 %v401
    %v441 = vunpack.c.l.b16 %v402
    %v442 = vunpack.c.l.b16 %v403
    %v443 = vunpack.c.l.b16 %v404
    %v444 = vunpack.c.l.b16 %v405
    %v445 = vunpack.c.l.b16 %v406
    %v446 = vunpack.c.l.b16 %v407
    %v447 = vunpack.c.l.b16 %v408
    %v448 = vunpack.c.l.b16 %v409
    %v449 = vunpack.c.l.b16 %v410
    %v450 = vunpack.c.l.b16 %v411
    %v451 = vunpack.c.l.b16 %v412
    %v452 = vunpack.c.l.b16 %v413
    %v453 = vpack.c.b16 %v438, %v437
    %v454 = vpack.c.b16 %v440, %v439
    %v455 = vpack.c.b16 %v442, %v441
    %v456 = vpack.c.b16 %v444, %v443
    %v457 = vpack.c.b16 %v446, %v445
    %v458 = vpack.c.b16 %v448, %v447
    %v459 = vpack.c.b16 %v450, %v449
    %v460 = vpack.c.b16 %v452, %v451
    %469 = vmatprep.subr.bf16.mxu0 0
    %470 = vmatpush1.bf16.msra.mxu0 %v453
    %471 = vmatprep.subr.bf16.mxu0 0
    %472 = vmatpush1.bf16.msra.mxu0 %v454
    %473 = vmatprep.subr.bf16.mxu0 0
    %474 = vmatpush1.bf16.msra.mxu0 %v455
    %475 = vmatprep.subr.bf16.mxu0 0
    %476 = vmatpush1.bf16.msra.mxu0 %v456
    %477 = vmatprep.subr.bf16.mxu0 0
    %478 = vmatpush1.bf16.msra.mxu0 %v457
    %479 = vmatprep.subr.bf16.mxu0 0
    %480 = vmatpush1.bf16.msra.mxu0 %v458
    %481 = vmatprep.subr.bf16.mxu0 0
    %482 = vmatpush1.bf16.msra.mxu0 %v459
    %483 = vmatprep.subr.bf16.mxu0 0
    %484 = vmatpush1.bf16.msra.mxu0 %v460
    %485 = vmatprep.subr.bf16.mxu0 0
    %486 = vmatpush1.bf16.msra.mxu0 0
    %487 = vmatprep.subr.bf16.mxu0 0
    %488 = vmatpush1.bf16.msra.mxu0 0
    %489 = vmatprep.subr.bf16.mxu0 0
    %490 = vmatpush1.bf16.msra.mxu0 0
    %491 = vmatprep.subr.bf16.mxu0 0
    %492 = vmatpush1.bf16.msra.mxu0 0
    %493 = vmatprep.subr.bf16.mxu0 0
    %494 = vmatpush1.bf16.msra.mxu0 0
    %495 = vmatprep.subr.bf16.mxu0 0
    %496 = vmatpush1.bf16.msra.mxu0 0
    %497 = vmatprep.subr.bf16.mxu0 0
    %498 = vmatpush1.bf16.msra.mxu0 0
    %499 = vmatprep.subr.bf16.mxu0 0
    %500 = vmatpush1.bf16.msra.mxu0 0
    %501 = vmatprep.mubr.bf16.mxu0 0
    %502 = vmatmul.mubr.bf16.gmra.mrb[0].mxu0 %v397
    %v503 = vpop.f32.mrb[0].mxu0
    %v504 = vadd.f32 %v419, %v503
    %v505 = vpop.f32.mrb[0].mxu0
    %v506 = vpop.f32.mrb[0].mxu0
    %v507 = vpop.f32.mrb[0].mxu0
    %508 = vdwg.mxu0
    %vm509 = vcmask 64512
    %510 = vst.msk [vmem:[#allocation7] sm:$0xff] %vm509, %v504
    // Predicated region
    $region46: #{tpu_custom_call.1} parent=1 // pred_check
      _
    $region47: #{tpu_custom_call.1} parent=1 // pred_check_branch
      %512 = sbr.rel (0) target = $region49
    $region48: #{tpu_custom_call.1} parent=1 // pred_region
      %s514 = ssub.s32 128, 64
      %515 = vsyncadd [#allocation4], %s514
      %s516 = sshll.u32 [#allocation7], 4
      %s517 = int_to_ptr.vmem [resolvable:$true] %s516
      %522 = dma.vmem_to_hbm [thread:$0]  %s517, 64, %s9, [#allocation4], 64, 64, 4
    $region49: #{tpu_custom_call.1} parent=1 // pred_fallthru
      _
    // Predicated region
    $region50: #{tpu_custom_call.1} parent=1 // pred_check
      _
    $region51: #{tpu_custom_call.1} parent=1 // pred_check_branch
      %524 = sbr.rel (0) target = $region53
    $region52: #{tpu_custom_call.1} parent=1 // pred_region
      %525 = dma.done [#allocation4], 128
    $region53: #{tpu_custom_call.1} parent=1 // pred_fallthru
      _
    %526 = vsyncpa [#allocation3], 1
    %527 = vsyncpa [#allocation6], 1
    %528 = vsyncpa [#allocation4], 1

</llo_original>
